<compile_context>
chip_gen: v5e
topology: v5e:2x2
jax: 0.10.0
libtpu: 0.0.40
codegen_flags: <defaults>
</compile_context>

<pallas_src>
import functools

import jax
import jax.numpy as jnp
from jax.experimental import pallas as pl
from jax.experimental.pallas import tpu as pltpu


LANE = 128


def _round_up(x: int, m: int) -> int:
    return ((x + m - 1) // m) * m


def _lsr_fused_kernel(h_ref, w_ref, b_ref, loc_ref, scale_ref, *, half):
    """One fused matmul for both heads, then per-head epilogue.

    h_ref:     [TB, D_in]         (compute dtype, f32 or bf16)
    w_ref:     [D_in, 2*half]     packed [w_loc_pad | w_lv_pad]
    b_ref:     [1,  2*half]       packed biases (f32)
    loc_ref:   [TB, half]
    scale_ref: [TB, half]
    """
    y = jnp.dot(h_ref[...], w_ref[...], preferred_element_type=jnp.float32)
    y = y + b_ref[...]                       # broadcast over rows (f32)

    # `half` is a multiple of 128, so these value-slices are lane-aligned.
    loc = y[:, :half]
    log_var = jnp.clip(y[:, half:], -6.0, 2.0)   # Hardtanh(-6, 2)  (VPU)

    loc_ref[...] = loc.astype(loc_ref.dtype)
    # scale = exp(log_var / 2)   (exp runs on the EUP -> effectively free)
    scale_ref[...] = jnp.exp(0.5 * log_var).astype(scale_ref.dtype)


def lsr_forward(hidden, w_loc, b_loc, w_lv, b_lv, *,
                compute_dtype=jnp.float32, block_rows=512):
    """Returns (loc, scale) of Independent(Normal(loc, scale), 1).

    hidden: [B, D_in] f32
    w_loc/w_lv: [D_in, out_dim] f32 ; b_loc/b_lv: [1, out_dim] (or [out_dim]) f32

    block_rows: batch tile size (rows per grid step).  512 is a good default
    for v5e/v6e; on v7x (64 MiB VMEM) keep it <= 512 for very wide models.
    compute_dtype: dtype of the MXU operands (hidden + weights). bf16 halves
    HBM bytes on the memory-bound path; accumulation stays f32.
    """
    B, D_in = hidden.shape
    out_dim = w_loc.shape[1]
    P = _round_up(out_dim, LANE)          # lane-dense per-head width
    W = 2 * P                             # fused output width

    # --- pack both heads into one lane-dense weight / bias ------------------
    w_pack = jnp.zeros((D_in, W), jnp.float32)
    w_pack = w_pack.at[:, :out_dim].set(w_loc.astype(jnp.float32))
    w_pack = w_pack.at[:, P:P + out_dim].set(w_lv.astype(jnp.float32))

    b_pack = jnp.zeros((1, W), jnp.float32)
    b_pack = b_pack.at[:, :out_dim].set(jnp.reshape(b_loc, (1, -1)))
    b_pack = b_pack.at[:, P:P + out_dim].set(jnp.reshape(b_lv, (1, -1)))

    # MXU operands in compute dtype; bias stays f32 (added post-accumulate).
    w_pack = w_pack.astype(compute_dtype)
    h = hidden.astype(compute_dtype)

    # --- batch tiling --------------------------------------------------------
    if B <= block_rows:
        tb = _round_up(B, 8)
    else:
        tb = block_rows
    b_pad = _round_up(B, tb)
    if b_pad != B:
        h = jnp.pad(h, ((0, b_pad - B), (0, 0)))

    grid = (b_pad // tb,)

    kernel = functools.partial(_lsr_fused_kernel, half=P)

    loc_p, scale_p = pl.pallas_call(
        kernel,
        out_shape=(
            jax.ShapeDtypeStruct((b_pad, P), jnp.float32),
            jax.ShapeDtypeStruct((b_pad, P), jnp.float32),
        ),
        grid=grid,
        in_specs=[
            pl.BlockSpec((tb, D_in), lambda i: (i, 0)),   # hidden: tiled over batch
            pl.BlockSpec((D_in, W), lambda i: (0, 0)),    # fused weights: resident
            pl.BlockSpec((1, W), lambda i: (0, 0)),       # fused bias: resident
        ],
        out_specs=(
            pl.BlockSpec((tb, P), lambda i: (i, 0)),
            pl.BlockSpec((tb, P), lambda i: (i, 0)),
        ),
        compiler_params=pltpu.CompilerParams(
            dimension_semantics=("parallel",),            # shard batch across TCs on v7x
        ),
    )(h, w_pack, b_pack)

    # Unpad back to the logical shapes.
    return loc_p[:B, :out_dim], scale_p[:B, :out_dim]


def init_params(key, input_dim, out_dim):
    """Deterministic PyTorch-Linear-style init (uniform +/- 1/sqrt(fan_in))."""
    k1, k2, k3, k4 = jax.random.split(key, 4)
    bound = 1.0 / jnp.sqrt(input_dim)
    w_loc = jax.random.uniform(k1, (input_dim, out_dim), jnp.float32, -bound, bound)
    b_loc = jax.random.uniform(k2, (1, out_dim), jnp.float32, -bound, bound)
    w_lv = jax.random.uniform(k3, (input_dim, out_dim), jnp.float32, -bound, bound)
    b_lv = jax.random.uniform(k4, (1, out_dim), jnp.float32, -bound, bound)
    return w_loc, b_loc, w_lv, b_lv


if __name__ == "__main__":
    key = jax.random.PRNGKey(0)
    k_h, k_p = jax.random.split(key)

    batch, input_dim, out_dim = 8, 64, 32
    hidden = jax.random.normal(k_h, (batch, input_dim), jnp.float32)
    w_loc, b_loc, w_lv, b_lv = init_params(k_p, input_dim, out_dim)

    # Plain JAX reference.
    loc_ref = hidden @ w_loc + b_loc
    log_var_ref = jnp.clip(hidden @ w_lv + b_lv, -6.0, 2.0)
    scale_ref = jnp.exp(0.5 * log_var_ref)

    # f32 path (strict check).
    loc, scale = lsr_forward(hidden, w_loc, b_loc, w_lv, b_lv)
    jax.block_until_ready((loc, scale))
    assert loc.shape == (batch, out_dim) and scale.shape == (batch, out_dim)
    assert jnp.allclose(loc, loc_ref, atol=1e-5, rtol=1e-5)
    assert jnp.allclose(scale, scale_ref, atol=1e-5, rtol=1e-5)

    # bf16 MXU-operand path (memory-bound optimization; looser tolerance).
    loc_bf, scale_bf = lsr_forward(hidden, w_loc, b_loc, w_lv, b_lv,
                                   compute_dtype=jnp.bfloat16)
    jax.block_until_ready((loc_bf, scale_bf))
    assert jnp.allclose(loc_bf, loc_ref, atol=0.1, rtol=0.1)
    assert jnp.allclose(scale_bf, scale_ref, atol=0.1, rtol=0.1)

    print("KERNEL_OK")
</pallas_src>

<mosaic_0001>
module attributes {stable_mosaic.version = 11 : i64} {
  func.func @_lsr_fused_kernel(%arg0: i32, %arg1: memref<8x64xf32, #tpu.memory_space<vmem>>, %arg2: memref<64x256xf32, #tpu.memory_space<vmem>>, %arg3: memref<1x256xf32, #tpu.memory_space<vmem>>, %arg4: memref<8x128xf32, #tpu.memory_space<vmem>>, %arg5: memref<8x128xf32, #tpu.memory_space<vmem>>) attributes {dimension_semantics = [#tpu.dimension_semantics<parallel>], iteration_bounds = array<i64: 1>, scalar_prefetch = 0 : i64, scratch_operands = 0 : i64, tpu.core_type = #tpu.core_type<tc>, window_params = [{transform_indices = @transform_0, window_bounds = array<i64: 8, 64>}, {pipeline_mode = #tpu.pipeline_mode<synchronous>, transform_indices = @transform_1, window_bounds = array<i64: 64, 256>}, {pipeline_mode = #tpu.pipeline_mode<synchronous>, transform_indices = @transform_2, window_bounds = array<i64: 1, 256>}, {transform_indices = @transform_3, window_bounds = array<i64: 8, 128>}, {transform_indices = @transform_4, window_bounds = array<i64: 8, 128>}]} {
    %c0 = arith.constant 0 : index
    %c0_0 = arith.constant 0 : index
    %0 = vector.load %arg1[%c0, %c0_0] : memref<8x64xf32, #tpu.memory_space<vmem>>, vector<8x64xf32>
    %c0_1 = arith.constant 0 : index
    %c0_2 = arith.constant 0 : index
    %1 = vector.load %arg2[%c0_1, %c0_2] : memref<64x256xf32, #tpu.memory_space<vmem>>, vector<64x256xf32>
    %cst = arith.constant dense<0.000000e+00> : vector<8x256xf32>
    %2 = tpu.matmul %0, %1, %cst {dimension_numbers = #tpu.dot_dimension_numbers<[1], [0], [0], [1], [0, 0, 1, 1], [], []>} : vector<8x64xf32>, vector<64x256xf32>, vector<8x256xf32> -> vector<8x256xf32>
    %c0_3 = arith.constant 0 : index
    %c0_4 = arith.constant 0 : index
    %3 = vector.load %arg3[%c0_3, %c0_4] : memref<1x256xf32, #tpu.memory_space<vmem>>, vector<1x256xf32>
    %4 = vector.broadcast %3 : vector<1x256xf32> to vector<8x256xf32>
    %5 = arith.addf %2, %4 : vector<8x256xf32>
    %6 = vector.extract_strided_slice %5 {offsets = [0, 0], sizes = [8, 128], strides = [1, 1]} : vector<8x256xf32> to vector<8x128xf32>
    %7 = vector.extract_strided_slice %5 {offsets = [0, 128], sizes = [8, 128], strides = [1, 1]} : vector<8x256xf32> to vector<8x128xf32>
    %cst_5 = arith.constant -6.000000e+00 : f32
    %cst_6 = arith.constant 2.000000e+00 : f32
    %8 = vector.broadcast %cst_5 : f32 to vector<8x128xf32>
    %9 = arith.maximumf %8, %7 : vector<8x128xf32>
    %10 = vector.broadcast %cst_6 : f32 to vector<8x128xf32>
    %11 = arith.minimumf %10, %9 : vector<8x128xf32>
    %c0_7 = arith.constant 0 : index
    %c0_8 = arith.constant 0 : index
    %12 = vector.load %arg4[%c0_7, %c0_8] : memref<8x128xf32, #tpu.memory_space<vmem>>, vector<8x128xf32>
    tpu.vector_store %arg4[%c0_7, %c0_8], %6 {strides = array<i32>} : memref<8x128xf32, #tpu.memory_space<vmem>>, vector<8x128xf32>,
    %cst_9 = arith.constant 5.000000e-01 : f32
    %13 = vector.broadcast %cst_9 : f32 to vector<8x128xf32>
    %14 = arith.mulf %13, %11 : vector<8x128xf32>
    %15 = math.exp %14 : vector<8x128xf32>
    %c0_10 = arith.constant 0 : index
    %c0_11 = arith.constant 0 : index
    %16 = vector.load %arg5[%c0_10, %c0_11] : memref<8x128xf32, #tpu.memory_space<vmem>>, vector<8x128xf32>
    tpu.vector_store %arg5[%c0_10, %c0_11], %15 {strides = array<i32>} : memref<8x128xf32, #tpu.memory_space<vmem>>, vector<8x128xf32>,
    return
  }
  func.func @transform_0(%arg0: i32) -> (i32, i32) {
    %c0_i32 = arith.constant 0 : i32
    %c0_i32_0 = arith.constant 0 : i32
    return %arg0, %c0_i32 : i32, i32
  }
  func.func @transform_1(%arg0: i32) -> (i32, i32) {
    %c0_i32 = arith.constant 0 : i32
    %c0_i32_0 = arith.constant 0 : i32
    %c0_i32_1 = arith.constant 0 : i32
    return %c0_i32, %c0_i32_0 : i32, i32
  }
  func.func @transform_2(%arg0: i32) -> (i32, i32) {
    %c0_i32 = arith.constant 0 : i32
    %c0_i32_0 = arith.constant 0 : i32
    %c0_i32_1 = arith.constant 0 : i32
    return %c0_i32, %c0_i32_0 : i32, i32
  }
  func.func @transform_3(%arg0: i32) -> (i32, i32) {
    %c0_i32 = arith.constant 0 : i32
    %c0_i32_0 = arith.constant 0 : i32
    return %arg0, %c0_i32 : i32, i32
  }
  func.func @transform_4(%arg0: i32) -> (i32, i32) {
    %c0_i32 = arith.constant 0 : i32
    %c0_i32_0 = arith.constant 0 : i32
    return %arg0, %c0_i32 : i32, i32
  }
}

</mosaic_0001>

<llo_original>
// kernel: tpu_custom_call.1
$region0: #{tpu_custom_call.1}
  #allocation0 [shape = 'u32[]', space=smem, size = 0x4, offset = 0x4, fixed_abs, tag = 'smem constant byte address 0x4 - core index']
  #allocation1 [shape = 'u32[72,128]{1,0:T(1,128)}', space=vmem, size = 0x9000, scoped, tag = 'internal scratch']
  %s0 = inlined_call_operand.hbm [shape: f32[8,64], index: 0, kind: input, shape index: {}]
  %s1 = inlined_call_operand.hbm [shape: f32[64,256], index: 1, kind: input, shape index: {}]
  %s2 = inlined_call_operand.hbm [shape: f32[1,256], index: 2, kind: input, shape index: {}]
  %s3 = inlined_call_operand.hbm [shape: f32[8,128], index: 3, kind: output, shape index: {0}]
  %s4 = inlined_call_operand.hbm [shape: f32[8,128], index: 4, kind: output, shape index: {1}]
  %5 = xla_tuple %s3, %s4
  %s6 = sld [smem:[#allocation0]]
  $region42: #{tpu_custom_call.1} parent=0
    _
  %s8 = ssub.s32 1, %s6
  %s9 = scalar_select 0, %s8, %s6
  $region1: #{tpu_custom_call.1} parent=0
    #allocation2 [shape = 'u8[4096]{0}', space=vmem, size = 0x1000, scoped, tag = 'input window, operand 0, single buffered']
    #allocation3 [shape = 's32[1]{0}', space=sflag, size = 0x4, scoped, tag = 'scoped memory for tpu_custom_call.1']
    #allocation4 [shape = 's32[1]{0}', space=sflag, size = 0x4, scoped, tag = 'scoped memory for tpu_custom_call.1']
    #allocation5 [shape = 'u8[65536]{0}', space=vmem, size = 0x10000, scoped, tag = 'input window, operand 1, single buffered']
    #allocation6 [shape = 's32[1]{0}', space=sflag, size = 0x4, scoped, tag = 'scoped memory for tpu_custom_call.1']
    #allocation7 [shape = 'u8[1024]{0}', space=vmem, size = 0x400, scoped, tag = 'input window, operand 2, single buffered']
    #allocation8 [shape = 'u8[4096]{0}', space=vmem, size = 0x1000, scoped, tag = 'output window, operand 0, single buffered']
    #allocation9 [shape = 'u8[4096]{0}', space=vmem, size = 0x1000, scoped, tag = 'output window, operand 1, single buffered']
    #allocation10 [shape = 's32[1]{0}', space=sflag, size = 0x4, scoped, tag = 'scoped memory for tpu_custom_call.1']
    %10 = vsyncpa [#allocation3], 0
    %11 = vsyncpa [#allocation6], 0
    %12 = vsyncpa [#allocation4], 0
    %13 = vsyncpa [#allocation10], 0
    // Predicated region
    $region2: #{tpu_custom_call.1} parent=1 // pred_check
      _
    $region3: #{tpu_custom_call.1} parent=1 // pred_check_branch
      %15 = sbr.rel (0) target = $region5
    $region4: #{tpu_custom_call.1} parent=1 // pred_region
      %17 = vsyncadd [#allocation3], 0
      %s19 = sshll.u32 %s0, 4
      %s20 = int_to_ptr.hbm [resolvable:$true] %s19
      %s21 = sshll.u32 [#allocation2], 4
      %s22 = int_to_ptr.vmem [resolvable:$true] %s21
      %24 = dma.hbm_to_vmem [thread:$0]  %s20, 128, %s22, [#allocation3]
    $region5: #{tpu_custom_call.1} parent=1 // pred_fallthru
      _
    // Predicated region
    $region6: #{tpu_custom_call.1} parent=1 // pred_check
      _
    $region7: #{tpu_custom_call.1} parent=1 // pred_check_branch
      %26 = sbr.rel (0) target = $region9
    $region8: #{tpu_custom_call.1} parent=1 // pred_region
      %28 = vsyncadd [#allocation6], 0
      %s29 = sshll.u32 %s1, 4
      %s30 = int_to_ptr.hbm [resolvable:$true] %s29
      %s31 = sshll.u32 [#allocation5], 4
      %s32 = int_to_ptr.vmem [resolvable:$true] %s31
      %37 = dma.hbm_to_vmem [thread:$0]  %s30, 2048, %s32, [#allocation6], 256, 256, 16
    $region9: #{tpu_custom_call.1} parent=1 // pred_fallthru
      _
    // Predicated region
    $region10: #{tpu_custom_call.1} parent=1 // pred_check
      _
    $region11: #{tpu_custom_call.1} parent=1 // pred_check_branch
      %39 = sbr.rel (0) target = $region13
    $region12: #{tpu_custom_call.1} parent=1 // pred_region
      %41 = vsyncadd [#allocation6], 0
      %s43 = sshll.u32 %s2, 4
      %s44 = int_to_ptr.hbm [resolvable:$true] %s43
      %s45 = sshll.u32 [#allocation7], 4
      %s46 = int_to_ptr.vmem [resolvable:$true] %s45
      %48 = dma.hbm_to_vmem [thread:$0]  %s44, 32, %s46, [#allocation6]
    $region13: #{tpu_custom_call.1} parent=1 // pred_fallthru
      _
    // Predicated region
    $region14: #{tpu_custom_call.1} parent=1 // pred_check
      _
    $region15: #{tpu_custom_call.1} parent=1 // pred_check_branch
      %50 = sbr.rel (0) target = $region17
    $region16: #{tpu_custom_call.1} parent=1 // pred_region
      %52 = dma.done [#allocation3], 128
    $region17: #{tpu_custom_call.1} parent=1 // pred_fallthru
      _
    // Predicated region
    $region18: #{tpu_custom_call.1} parent=1 // pred_check
      _
    $region19: #{tpu_custom_call.1} parent=1 // pred_check_branch
      %54 = sbr.rel (0) target = $region21
    $region20: #{tpu_custom_call.1} parent=1 // pred_region
      %56 = dma.done [#allocation6], 2048
    $region21: #{tpu_custom_call.1} parent=1 // pred_fallthru
      _
    // Predicated region
    $region22: #{tpu_custom_call.1} parent=1 // pred_check
      _
    $region23: #{tpu_custom_call.1} parent=1 // pred_check_branch
      %58 = sbr.rel (0) target = $region25
    $region24: #{tpu_custom_call.1} parent=1 // pred_region
      %60 = dma.done [#allocation6], 32
    $region25: #{tpu_custom_call.1} parent=1 // pred_fallthru
      _
    %v61 = vld [vmem:[#allocation2] sm:$0xff]
    %v62 = vld [vmem:[#allocation5] sm:$0xff]
    %v63 = vld [vmem:[#allocation5 + $0x8] sm:$0xff]
    %v64 = vld [vmem:[#allocation5 + $0x10] sm:$0xff]
    %v65 = vld [vmem:[#allocation5 + $0x18] sm:$0xff]
    %v66 = vld [vmem:[#allocation5 + $0x20] sm:$0xff]
    %v67 = vld [vmem:[#allocation5 + $0x28] sm:$0xff]
    %v68 = vld [vmem:[#allocation5 + $0x30] sm:$0xff]
    %v69 = vld [vmem:[#allocation5 + $0x38] sm:$0xff]
    %v70 = vld [vmem:[#allocation5 + $0x40] sm:$0xff]
    %v71 = vld [vmem:[#allocation5 + $0x48] sm:$0xff]
    %v72 = vld [vmem:[#allocation5 + $0x50] sm:$0xff]
    %v73 = vld [vmem:[#allocation5 + $0x58] sm:$0xff]
    %v74 = vld [vmem:[#allocation5 + $0x60] sm:$0xff]
    %v75 = vld [vmem:[#allocation5 + $0x68] sm:$0xff]
    %v76 = vld [vmem:[#allocation5 + $0x70] sm:$0xff]
    %v77 = vld [vmem:[#allocation5 + $0x78] sm:$0xff]
    %v78 = vld [vmem:[#allocation7] sm:$0x3]
    %v80 = vperm.slane %v78, 0
    %v81 = vperm.slane %v78, 1
    %vm84 = vcmask 523264
    %v86 = vsel %vm84, %v61, 0
    %88 = vmatpush.msra.mxu0 0.0
    %89 = vmatpush.msra.mxu0 0.0
    %90 = vmatpush.msra.mxu0 0.0
    %91 = vmatpush.msra.mxu0 0.0
    %92 = vmatpush.msra.mxu0 0.0
    %93 = vmatpush.msra.mxu0 0.0
    %94 = vmatpush.msra.mxu0 0.0
    %95 = vmatpush.msra.mxu0 0.0
    %96 = vmatpush.msra.mxu0 %v76
    %97 = vmatpush.msra.mxu0 %v74
    %98 = vmatpush.msra.mxu0 %v72
    %99 = vmatpush.msra.mxu0 %v70
    %100 = vmatpush.msra.mxu0 %v68
    %101 = vmatpush.msra.mxu0 %v66
    %102 = vmatpush.msra.mxu0 %v64
    %103 = vmatpush.msra.mxu0 %v62
    %104 = vmatmul.f32.gmra.mxu0 %v86
    %v105 = vpop.f32.mrf.mxu0
    %v106 = vadd.f32 %v80, %v105
    %107 = vdwg.mxu0
    %108 = vmatpush.msra.mxu0 0.0
    %109 = vmatpush.msra.mxu0 0.0
    %110 = vmatpush.msra.mxu0 0.0
    %111 = vmatpush.msra.mxu0 0.0
    %112 = vmatpush.msra.mxu0 0.0
    %113 = vmatpush.msra.mxu0 0.0
    %114 = vmatpush.msra.mxu0 0.0
    %115 = vmatpush.msra.mxu0 0.0
    %116 = vmatpush.msra.mxu0 %v77
    %117 = vmatpush.msra.mxu0 %v75
    %118 = vmatpush.msra.mxu0 %v73
    %119 = vmatpush.msra.mxu0 %v71
    %120 = vmatpush.msra.mxu0 %v69
    %121 = vmatpush.msra.mxu0 %v67
    %122 = vmatpush.msra.mxu0 %v65
    %123 = vmatpush.msra.mxu0 %v63
    %124 = vmatmul.f32.gmra.mxu0 %v86
    %v125 = vpop.f32.mrf.mxu0
    %v126 = vadd.f32 %v81, %v125
    %127 = vdwg.mxu0
    %v128 = vmax.f32 %v126, -6.0
    %v129 = vmin.f32 %v128, 2.0
    %130 = vst [vmem:[#allocation8] sm:$0xff] %v106
    %v131 = vmul.f32 %v129, 0.5
    %v132 = vmul.f32 %v131, 1.442695
    %v133 = vpow.pop %v132
    %134 = vst [vmem:[#allocation9] sm:$0xff] %v133
    // Predicated region
    $region26: #{tpu_custom_call.1} parent=1 // pred_check
      _
    $region27: #{tpu_custom_call.1} parent=1 // pred_check_branch
      %136 = sbr.rel (0) target = $region29
    $region28: #{tpu_custom_call.1} parent=1 // pred_region
      %138 = vsyncadd [#allocation4], 0
      %s140 = sshll.u32 [#allocation8], 4
      %s141 = int_to_ptr.vmem [resolvable:$true] %s140
      %s142 = sshll.u32 %s3, 4
      %s143 = int_to_ptr.hbm [resolvable:$true] %s142
      %145 = dma.vmem_to_hbm [thread:$0]  %s141, 128, %s143, [#allocation4]
    $region29: #{tpu_custom_call.1} parent=1 // pred_fallthru
      _
    // Predicated region
    $region30: #{tpu_custom_call.1} parent=1 // pred_check
      _
    $region31: #{tpu_custom_call.1} parent=1 // pred_check_branch
      %147 = sbr.rel (0) target = $region33
    $region32: #{tpu_custom_call.1} parent=1 // pred_region
      %149 = vsyncadd [#allocation10], 0
      %s151 = sshll.u32 [#allocation9], 4
      %s152 = int_to_ptr.vmem [resolvable:$true] %s151
      %s153 = sshll.u32 %s4, 4
      %s154 = int_to_ptr.hbm [resolvable:$true] %s153
      %156 = dma.vmem_to_hbm [thread:$0]  %s152, 128, %s154, [#allocation10]
    $region33: #{tpu_custom_call.1} parent=1 // pred_fallthru
      _
    // Predicated region
    $region34: #{tpu_custom_call.1} parent=1 // pred_check
      _
    $region35: #{tpu_custom_call.1} parent=1 // pred_check_branch
      %158 = sbr.rel (0) target = $region37
    $region36: #{tpu_custom_call.1} parent=1 // pred_region
      %160 = dma.done [#allocation4], 128
    $region37: #{tpu_custom_call.1} parent=1 // pred_fallthru
      _
    // Predicated region
    $region38: #{tpu_custom_call.1} parent=1 // pred_check
      _
    $region39: #{tpu_custom_call.1} parent=1 // pred_check_branch
      %162 = sbr.rel (0) target = $region41
    $region40: #{tpu_custom_call.1} parent=1 // pred_region
      %164 = dma.done [#allocation10], 128
    $region41: #{tpu_custom_call.1} parent=1 // pred_fallthru
      _
    %165 = vsyncpa [#allocation3], 1
    %166 = vsyncpa [#allocation6], 1
    %167 = vsyncpa [#allocation4], 1
    %168 = vsyncpa [#allocation10], 1

</llo_original>
